<compile_context>
chip_gen: v6e
topology: v6e:2x2x1
jax: 0.10.0
libtpu: 0.0.40
codegen_flags: <defaults>
</compile_context>

<pallas_src>
import functools

import jax
import jax.numpy as jnp
from jax.experimental import pallas as pl
from jax.experimental.pallas import tpu as pltpu


def _round_up(x: int, m: int) -> int:
    return (x + m - 1) // m * m


def _decoder_kernel(z_ref, w1_ref, b1_ref, w2_ref, b2_ref, o_ref):
    # z arrives as f32 straight from HBM (no wrapper pad/cast pass); cast to
    # bf16 in-register for the first MXU pass, accumulate in f32.
    z = z_ref[...].astype(jnp.bfloat16)                               # (tb, d_in)
    h = jnp.dot(z, w1_ref[...], preferred_element_type=jnp.float32)   # (tb, hid_p)
    h = jnp.tanh(h + b1_ref[...])                                     # f32
    # Second matmul: keep h in f32 (cheap -- kernel is HBM-bound) for accuracy;
    # w2 is stored bf16 in HBM/VMEM and widened in-register.
    out = jnp.dot(h, w2_ref[...].astype(jnp.float32),
                  preferred_element_type=jnp.float32)                 # (tb, out)
    o_ref[...] = (out + b2_ref[...]).astype(o_ref.dtype)


def prepare_params(w1, b1, w2, b2):
    """One-time weight prep: bf16 weights, hidden dim zero-padded to a lane
    multiple (exact math: padded h columns are tanh(0)=0, padded W2 rows are 0).

    w1: (d_in, hidden), b1: (hidden,), w2: (hidden, out), b2: (out,) -- the
    transposed layout of PyTorch's nn.Linear weights, so the kernel computes
    x @ W + b (identical math). d_in and out stay unpadded (full-dim blocks).
    """
    d_in, hidden = w1.shape
    out_dim = w2.shape[1]
    hid_p = _round_up(hidden, 128)

    w1_p = jnp.zeros((d_in, hid_p), jnp.bfloat16).at[:, :hidden].set(
        w1.astype(jnp.bfloat16))
    w2_p = jnp.zeros((hid_p, out_dim), jnp.bfloat16).at[:hidden, :].set(
        w2.astype(jnp.bfloat16))
    b1_p = jnp.zeros((1, hid_p), jnp.float32).at[0, :hidden].set(
        b1.astype(jnp.float32))
    b2_p = b2.astype(jnp.float32).reshape(1, out_dim)
    return {
        "w1": w1_p, "b1": b1_p, "w2": w2_p, "b2": b2_p,
        "d_in": d_in, "hidden": hidden, "out_dim": out_dim,
    }


def _default_batch_tile(b: int) -> int:
    # Tiny B: a single full-dim tile (legal even if not 8-aligned, no masking).
    if b <= 32:
        return b
    # Otherwise: at least 2 tiles so v7x's two TensorCores both get work,
    # rows a multiple of 8 (f32 sublane), capped at 512 so the VMEM footprint
    # (~6 MiB with double buffers) fits every generation while amortizing the
    # ~0.35 us per-grid-step overhead.
    return max(8, min(512, _round_up(pl.cdiv(b, 2), 8)))


@functools.partial(jax.jit, static_argnames=("batch_tile",))
def _decoder_call(z, w1, b1, w2, b2, *, batch_tile):
    b, d_in = z.shape
    hid_p = w1.shape[1]
    out_dim = w2.shape[1]
    tb = batch_tile
    n_tiles = pl.cdiv(b, tb)

    cost = pl.CostEstimate(
        flops=2 * b * (d_in * hid_p + hid_p * out_dim),
        transcendentals=b * hid_p,
        bytes_accessed=(z.size * 4                 # f32 activations in
                        + w1.size * 2 + w2.size * 2  # bf16 weights
                        + b1.size * 4 + b2.size * 4  # f32 biases
                        + b * out_dim * 4),          # f32 out
    )

    return pl.pallas_call(
        _decoder_kernel,
        out_shape=jax.ShapeDtypeStruct((b, out_dim), jnp.float32),
        grid=(n_tiles,),
        in_specs=[
            pl.BlockSpec((tb, d_in), lambda i: (i, 0)),       # z: tiled over batch
            pl.BlockSpec((d_in, hid_p), lambda i: (0, 0)),    # w1: VMEM-resident
            pl.BlockSpec((1, hid_p), lambda i: (0, 0)),       # b1: resident
            pl.BlockSpec((hid_p, out_dim), lambda i: (0, 0)),  # w2: resident
            pl.BlockSpec((1, out_dim), lambda i: (0, 0)),     # b2: resident
        ],
        out_specs=pl.BlockSpec((tb, out_dim), lambda i: (i, 0)),
        compiler_params=pltpu.CompilerParams(
            dimension_semantics=("parallel",)),  # v7x: batch tiles across both TCs
        cost_estimate=cost,
    )(z, w1, b1, w2, b2)


def decoder_forward(z, params, *, batch_tile=None):
    """z: (B, latent_num*latent_dim) float32. Returns (B, output) float32."""
    b, d_in = z.shape
    assert d_in == params["d_in"]
    if batch_tile is None:
        batch_tile = _default_batch_tile(b)
    return _decoder_call(
        z.astype(jnp.float32),
        params["w1"], params["b1"], params["w2"], params["b2"],
        batch_tile=batch_tile)


def init_params(key, latent_num=30, latent_dim=10, hidden=200, output=784):
    """Deterministic synthetic parameters matching nn.Linear shapes.

    PyTorch stores fc.weight as (out, in); we keep the transposed (in, out)
    layout so the kernel computes x @ W + b (identical math).
    """
    d_in = latent_num * latent_dim
    k1, k2, k3, k4 = jax.random.split(key, 4)
    lim1 = 1.0 / jnp.sqrt(d_in)
    lim2 = 1.0 / jnp.sqrt(hidden)
    w1 = jax.random.uniform(k1, (d_in, hidden), jnp.float32, -lim1, lim1)
    b1 = jax.random.uniform(k2, (hidden,), jnp.float32, -lim1, lim1)
    w2 = jax.random.uniform(k3, (hidden, output), jnp.float32, -lim2, lim2)
    b2 = jax.random.uniform(k4, (output,), jnp.float32, -lim2, lim2)
    return w1, b1, w2, b2


if __name__ == "__main__":
    latent_num, latent_dim, hidden, output = 30, 10, 200, 784
    batch = 2

    key = jax.random.PRNGKey(0)
    k_params, k_z = jax.random.split(key)
    w1, b1, w2, b2 = init_params(k_params, latent_num, latent_dim, hidden, output)
    params = prepare_params(w1, b1, w2, b2)
    z = jax.random.normal(k_z, (batch, latent_num * latent_dim), jnp.float32)

    out = decoder_forward(z, params)
    jax.block_until_ready(out)
    assert out.shape == (batch, output)

    # Correctness vs. the exact f32 PyTorch math (loose tol: bf16 weights/acts).
    ref_f32 = jnp.tanh(z @ w1 + b1[None, :]) @ w2 + b2[None, :]
    assert jnp.allclose(out, ref_f32, atol=3e-2, rtol=3e-2)

    # Tighter check vs. a reference using the same bf16-cast weights / z
    # (h stays f32 in the kernel's second matmul).
    w1b = w1.astype(jnp.bfloat16).astype(jnp.float32)
    w2b = w2.astype(jnp.bfloat16).astype(jnp.float32)
    zb = z.astype(jnp.bfloat16).astype(jnp.float32)
    ref_bf16 = jnp.tanh(zb @ w1b + b1[None, :]) @ w2b + b2[None, :]
    assert jnp.allclose(out, ref_bf16, atol=1e-2, rtol=1e-2)

    print("KERNEL_OK")
</pallas_src>

<mosaic_0001>
module attributes {stable_mosaic.version = 11 : i64} {
  func.func @_decoder_kernel(%arg0: i32, %arg1: memref<2x300xf32, #tpu.memory_space<vmem>>, %arg2: memref<300x256xbf16, #tpu.memory_space<vmem>>, %arg3: memref<1x256xf32, #tpu.memory_space<vmem>>, %arg4: memref<256x784xbf16, #tpu.memory_space<vmem>>, %arg5: memref<1x784xf32, #tpu.memory_space<vmem>>, %arg6: memref<2x784xf32, #tpu.memory_space<vmem>>) attributes {dimension_semantics = [#tpu.dimension_semantics<parallel>], iteration_bounds = array<i64: 1>, scalar_prefetch = 0 : i64, scratch_operands = 0 : i64, tpu.core_type = #tpu.core_type<tc>, window_params = [{transform_indices = @transform_0, window_bounds = array<i64: 2, 300>}, {pipeline_mode = #tpu.pipeline_mode<synchronous>, transform_indices = @transform_1, window_bounds = array<i64: 300, 256>}, {pipeline_mode = #tpu.pipeline_mode<synchronous>, transform_indices = @transform_2, window_bounds = array<i64: 1, 256>}, {pipeline_mode = #tpu.pipeline_mode<synchronous>, transform_indices = @transform_3, window_bounds = array<i64: 256, 784>}, {pipeline_mode = #tpu.pipeline_mode<synchronous>, transform_indices = @transform_4, window_bounds = array<i64: 1, 784>}, {transform_indices = @transform_5, window_bounds = array<i64: 2, 784>}]} {
    %c0 = arith.constant 0 : index
    %c0_0 = arith.constant 0 : index
    %0 = vector.load %arg1[%c0, %c0_0] : memref<2x300xf32, #tpu.memory_space<vmem>>, vector<2x300xf32>
    %1 = arith.truncf %0 : vector<2x300xf32> to vector<2x300xbf16>
    %c0_1 = arith.constant 0 : index
    %c0_2 = arith.constant 0 : index
    %2 = vector.load %arg2[%c0_1, %c0_2] : memref<300x256xbf16, #tpu.memory_space<vmem>>, vector<300x256xbf16>
    %cst = arith.constant dense<0.000000e+00> : vector<2x256xf32>
    %3 = tpu.matmul %1, %2, %cst {dimension_numbers = #tpu.dot_dimension_numbers<[1], [0], [0], [1], [0, 0, 1, 1], [], []>} : vector<2x300xbf16>, vector<300x256xbf16>, vector<2x256xf32> -> vector<2x256xf32>
    %c0_3 = arith.constant 0 : index
    %c0_4 = arith.constant 0 : index
    %4 = vector.load %arg3[%c0_3, %c0_4] : memref<1x256xf32, #tpu.memory_space<vmem>>, vector<1x256xf32>
    %5 = vector.broadcast %4 : vector<1x256xf32> to vector<2x256xf32>
    %6 = arith.addf %3, %5 : vector<2x256xf32>
    %7 = math.tanh %6 : vector<2x256xf32>
    %c0_5 = arith.constant 0 : index
    %c0_6 = arith.constant 0 : index
    %8 = vector.load %arg4[%c0_5, %c0_6] : memref<256x784xbf16, #tpu.memory_space<vmem>>, vector<256x784xbf16>
    %9 = arith.extf %8 : vector<256x784xbf16> to vector<256x784xf32>
    %cst_7 = arith.constant dense<0.000000e+00> : vector<2x784xf32>
    %10 = tpu.matmul %7, %9, %cst_7 {dimension_numbers = #tpu.dot_dimension_numbers<[1], [0], [0], [1], [0, 0, 1, 1], [], []>} : vector<2x256xf32>, vector<256x784xf32>, vector<2x784xf32> -> vector<2x784xf32>
    %c0_8 = arith.constant 0 : index
    %c0_9 = arith.constant 0 : index
    %11 = vector.load %arg5[%c0_8, %c0_9] : memref<1x784xf32, #tpu.memory_space<vmem>>, vector<1x784xf32>
    %12 = vector.broadcast %11 : vector<1x784xf32> to vector<2x784xf32>
    %13 = arith.addf %10, %12 : vector<2x784xf32>
    %c0_10 = arith.constant 0 : index
    %c0_11 = arith.constant 0 : index
    %14 = vector.load %arg6[%c0_10, %c0_11] : memref<2x784xf32, #tpu.memory_space<vmem>>, vector<2x784xf32>
    tpu.vector_store %arg6[%c0_10, %c0_11], %13 {strides = array<i32>} : memref<2x784xf32, #tpu.memory_space<vmem>>, vector<2x784xf32>,
    return
  }
  func.func @transform_0(%arg0: i32) -> (i32, i32) {
    %c0_i32 = arith.constant 0 : i32
    %c0_i32_0 = arith.constant 0 : i32
    return %arg0, %c0_i32 : i32, i32
  }
  func.func @transform_1(%arg0: i32) -> (i32, i32) {
    %c0_i32 = arith.constant 0 : i32
    %c0_i32_0 = arith.constant 0 : i32
    %c0_i32_1 = arith.constant 0 : i32
    return %c0_i32, %c0_i32_0 : i32, i32
  }
  func.func @transform_2(%arg0: i32) -> (i32, i32) {
    %c0_i32 = arith.constant 0 : i32
    %c0_i32_0 = arith.constant 0 : i32
    %c0_i32_1 = arith.constant 0 : i32
    return %c0_i32, %c0_i32_0 : i32, i32
  }
  func.func @transform_3(%arg0: i32) -> (i32, i32) {
    %c0_i32 = arith.constant 0 : i32
    %c0_i32_0 = arith.constant 0 : i32
    %c0_i32_1 = arith.constant 0 : i32
    return %c0_i32, %c0_i32_0 : i32, i32
  }
  func.func @transform_4(%arg0: i32) -> (i32, i32) {
    %c0_i32 = arith.constant 0 : i32
    %c0_i32_0 = arith.constant 0 : i32
    %c0_i32_1 = arith.constant 0 : i32
    return %c0_i32, %c0_i32_0 : i32, i32
  }
  func.func @transform_5(%arg0: i32) -> (i32, i32) {
    %c0_i32 = arith.constant 0 : i32
    %c0_i32_0 = arith.constant 0 : i32
    return %arg0, %c0_i32 : i32, i32
  }
}

</mosaic_0001>

<llo_original>
// kernel: _decoder_call.1
$region0: #{_decoder_call.1}
  #allocation0 [shape = 'u32[]', space=smem, size = 0x4, offset = 0x4, fixed_abs, tag = 'smem constant byte address 0x4 - core index']
  #allocation1 [shape = 'u32[144,128]{1,0:T(1,128)}', space=vmem, size = 0x12000, scoped, tag = 'internal scratch']
  %s0 = inlined_call_operand.vmem [shape: f32[2,300], index: 0, kind: input, shape index: {}]
  %s1 = inlined_call_operand.vmem [shape: bf16[300,256], index: 1, kind: input, shape index: {}]
  %s2 = inlined_call_operand.vmem [shape: f32[1,256], index: 2, kind: input, shape index: {}]
  %s3 = inlined_call_operand.vmem [shape: bf16[256,784], index: 3, kind: input, shape index: {}]
  %s4 = inlined_call_operand.vmem [shape: f32[1,784], index: 4, kind: input, shape index: {}]
  %s5 = inlined_call_operand.hbm [shape: f32[2,784], index: 5, kind: output, shape index: {}]
  %s6 = sld [smem:[#allocation0]]
  $region30: #{_decoder_call.1} parent=0
    _
  %s8 = ssub.s32 1, %s6
  %s9 = scalar_select 0, %s8, %s6
  $region1: #{_decoder_call.1} parent=0
    #allocation2 [shape = 'u8[7168]{0}', space=vmem, size = 0x1c00, scoped, tag = 'output window, operand 0, single buffered']
    #allocation3 [shape = 's32[1]{0}', space=sflag, size = 0x4, scoped, tag = 'scoped memory for _decoder_call.1']
    %10 = vsyncpa [#allocation3], 0
    // Predicated region
    $region2: #{_decoder_call.1} parent=1 // pred_check
      _
    $region3: #{_decoder_call.1} parent=1 // pred_check_branch
      %12 = sbr.rel (0) target = $region5
    $region4: #{_decoder_call.1} parent=1 // pred_region
      _
    $region5: #{_decoder_call.1} parent=1 // pred_fallthru
      _
    // Predicated region
    $region6: #{_decoder_call.1} parent=1 // pred_check
      _
    $region7: #{_decoder_call.1} parent=1 // pred_check_branch
      %14 = sbr.rel (0) target = $region9
    $region8: #{_decoder_call.1} parent=1 // pred_region
      _
    $region9: #{_decoder_call.1} parent=1 // pred_fallthru
      _
    // Predicated region
    $region10: #{_decoder_call.1} parent=1 // pred_check
      _
    $region11: #{_decoder_call.1} parent=1 // pred_check_branch
      %16 = sbr.rel (0) target = $region13
    $region12: #{_decoder_call.1} parent=1 // pred_region
      _
    $region13: #{_decoder_call.1} parent=1 // pred_fallthru
      _
    // Predicated region
    $region14: #{_decoder_call.1} parent=1 // pred_check
      _
    $region15: #{_decoder_call.1} parent=1 // pred_check_branch
      %18 = sbr.rel (0) target = $region17
    $region16: #{_decoder_call.1} parent=1 // pred_region
      _
    $region17: #{_decoder_call.1} parent=1 // pred_fallthru
      _
    // Predicated region
    $region18: #{_decoder_call.1} parent=1 // pred_check
      _
    $region19: #{_decoder_call.1} parent=1 // pred_check_branch
      %20 = sbr.rel (0) target = $region21
    $region20: #{_decoder_call.1} parent=1 // pred_region
      _
    $region21: #{_decoder_call.1} parent=1 // pred_fallthru
      _
    %v22 = vld [vmem:[%s0] sm:$0x3f]
    %v24 = vcombine.high %v22, %v22
    %v26 = vunpack.c.l.s4 1983009808
    %v27 = vunpack.c.0.s8 %v26
    %v28 = vlaneseq
    %v29 = vshrl.u32 %v28, 7
    %v30 = vsub.s32 %v27, %v29
    %v31 = vrot.slane %v22, %v30
    %v33 = vunpack.c.l.s4 1983009808
    %v34 = vunpack.c.0.s8 %v33
    %v35 = vlaneseq
    %v36 = vshrl.u32 %v35, 7
    %v37 = vsub.s32 %v34, %v36
    %v38 = vrot.slane %v24, %v37
    %v39 = vcombine.high %v31, %v31
    %v43 = vpack.c.bf16 %v31, %v31
    %v44 = vpack.c.bf16 %v39, %v39
    %v45 = vpack.c.bf16 %v38, %v38
    %v46 = vld [vmem:[%s1] sm:$0xff]
    %v47 = vld [vmem:[%s1 + $0x8] sm:$0xff]
    %v48 = vld [vmem:[%s1 + $0x10] sm:$0xff]
    %v49 = vld [vmem:[%s1 + $0x18] sm:$0xff]
    %v50 = vld [vmem:[%s1 + $0x20] sm:$0xff]
    %v51 = vld [vmem:[%s1 + $0x28] sm:$0xff]
    %v52 = vld [vmem:[%s1 + $0x30] sm:$0xff]
    %v53 = vld [vmem:[%s1 + $0x38] sm:$0xff]
    %v54 = vld [vmem:[%s1 + $0x40] sm:$0xff]
    %v55 = vld [vmem:[%s1 + $0x48] sm:$0xff]
    %v56 = vld [vmem:[%s1 + $0x50] sm:$0xff]
    %v57 = vld [vmem:[%s1 + $0x58] sm:$0xff]
    %v58 = vld [vmem:[%s1 + $0x60] sm:$0xff]
    %v59 = vld [vmem:[%s1 + $0x68] sm:$0xff]
    %v60 = vld [vmem:[%s1 + $0x70] sm:$0xff]
    %v61 = vld [vmem:[%s1 + $0x78] sm:$0xff]
    %v62 = vld [vmem:[%s1 + $0x80] sm:$0xff]
    %v63 = vld [vmem:[%s1 + $0x88] sm:$0xff]
    %v64 = vld [vmem:[%s1 + $0x90] sm:$0xff]
    %v65 = vld [vmem:[%s1 + $0x98] sm:$0xff]
    %v66 = vld [vmem:[%s1 + $0xa0] sm:$0xff]
    %v67 = vld [vmem:[%s1 + $0xa8] sm:$0xff]
    %v68 = vld [vmem:[%s1 + $0xb0] sm:$0xff]
    %v69 = vld [vmem:[%s1 + $0xb8] sm:$0xff]
    %v70 = vld [vmem:[%s1 + $0xc0] sm:$0xff]
    %v71 = vld [vmem:[%s1 + $0xc8] sm:$0xff]
    %v72 = vld [vmem:[%s1 + $0xd0] sm:$0xff]
    %v73 = vld [vmem:[%s1 + $0xd8] sm:$0xff]
    %v74 = vld [vmem:[%s1 + $0xe0] sm:$0xff]
    %v75 = vld [vmem:[%s1 + $0xe8] sm:$0xff]
    %v76 = vld [vmem:[%s1 + $0xf0] sm:$0xff]
    %v77 = vld [vmem:[%s1 + $0xf8] sm:$0xff]
    %v78 = vld [vmem:[%s1 + $0x100] sm:$0xff]
    %v79 = vld [vmem:[%s1 + $0x108] sm:$0xff]
    %v80 = vld [vmem:[%s1 + $0x110] sm:$0xff]
    %v81 = vld [vmem:[%s1 + $0x118] sm:$0xff]
    %v82 = vld [vmem:[%s1 + $0x120] sm:$0xff]
    %v83 = vld [vmem:[%s1 + $0x128] sm:$0x33]
    %v84 = vld [vmem:[%s2] sm:$0x3]
    %v86 = vlaneseq
    %v87 = vshrl.u32 %v86, 7
    %v88 = vsub.s32 0, %v87
    %v89 = vrot.slane %v84, %v88
    %v90 = vlaneseq
    %v91 = vshrl.u32 %v90, 7
    %v92 = vsub.s32 1, %v91
    %v93 = vrot.slane %v84, %v92
    %v134 = vunpack.c.l.b16 %v46
    %v135 = vunpack.c.h.b16 %v46
    %v136 = vunpack.c.l.b16 %v47
    %v137 = vunpack.c.h.b16 %v47
    %v138 = vunpack.c.l.b16 %v48
    %v139 = vunpack.c.h.b16 %v48
    %v140 = vunpack.c.l.b16 %v49
    %v141 = vunpack.c.h.b16 %v49
    %v142 = vunpack.c.l.b16 %v50
    %v143 = vunpack.c.h.b16 %v50
    %v144 = vunpack.c.l.b16 %v51
    %v145 = vunpack.c.h.b16 %v51
    %v146 = vunpack.c.l.b16 %v52
    %v147 = vunpack.c.h.b16 %v52
    %v148 = vunpack.c.l.b16 %v53
    %v149 = vunpack.c.h.b16 %v53
    %v150 = vunpack.c.l.b16 %v54
    %v151 = vunpack.c.h.b16 %v54
    %v152 = vunpack.c.l.b16 %v55
    %v153 = vunpack.c.h.b16 %v55
    %v154 = vunpack.c.l.b16 %v56
    %v155 = vunpack.c.h.b16 %v56
    %v156 = vunpack.c.l.b16 %v57
    %v157 = vunpack.c.h.b16 %v57
    %v158 = vunpack.c.l.b16 %v58
    %v159 = vunpack.c.h.b16 %v58
    %v160 = vunpack.c.l.b16 %v59
    %v161 = vunpack.c.h.b16 %v59
    %v162 = vunpack.c.l.b16 %v60
    %v163 = vunpack.c.h.b16 %v60
    %v164 = vunpack.c.l.b16 %v61
    %v165 = vunpack.c.h.b16 %v61
    %v166 = vunpack.c.l.b16 %v62
    %v167 = vunpack.c.h.b16 %v62
    %v168 = vunpack.c.l.b16 %v63
    %v169 = vunpack.c.h.b16 %v63
    %v170 = vunpack.c.l.b16 %v64
    %v171 = vunpack.c.h.b16 %v64
    %v172 = vunpack.c.l.b16 %v65
    %v173 = vunpack.c.h.b16 %v65
    %v174 = vunpack.c.l.b16 %v66
    %v175 = vunpack.c.h.b16 %v66
    %v176 = vunpack.c.l.b16 %v67
    %v177 = vunpack.c.h.b16 %v67
    %v178 = vunpack.c.l.b16 %v68
    %v179 = vunpack.c.h.b16 %v68
    %v180 = vunpack.c.l.b16 %v69
    %v181 = vunpack.c.h.b16 %v69
    %v182 = vunpack.c.l.b16 %v70
    %v183 = vunpack.c.h.b16 %v70
    %v184 = vunpack.c.l.b16 %v71
    %v185 = vunpack.c.h.b16 %v71
    %v186 = vunpack.c.l.b16 %v72
    %v187 = vunpack.c.h.b16 %v72
    %v188 = vunpack.c.l.b16 %v73
    %v189 = vunpack.c.h.b16 %v73
    %v190 = vunpack.c.l.b16 %v74
    %v191 = vunpack.c.h.b16 %v74
    %v192 = vunpack.c.l.b16 %v75
    %v193 = vunpack.c.h.b16 %v75
    %v194 = vunpack.c.l.b16 %v76
    %v195 = vunpack.c.h.b16 %v76
    %v196 = vunpack.c.l.b16 %v77
    %v197 = vunpack.c.h.b16 %v77
    %v198 = vunpack.c.l.b16 %v78
    %v199 = vunpack.c.h.b16 %v78
    %v200 = vunpack.c.l.b16 %v79
    %v201 = vunpack.c.h.b16 %v79
    %v202 = vunpack.c.l.b16 %v80
    %v203 = vunpack.c.h.b16 %v80
    %v204 = vunpack.c.l.b16 %v81
    %v205 = vunpack.c.h.b16 %v81
    %v206 = vunpack.c.l.b16 %v82
    %v207 = vunpack.c.h.b16 %v82
    %v208 = vunpack.c.l.b16 %v83
    %v209 = vunpack.c.h.b16 %v83
    %v210 = vpack.c.b16 %v136, %v134
    %v211 = vpack.c.b16 %v137, %v135
    %v212 = vpack.c.b16 %v140, %v138
    %v213 = vpack.c.b16 %v141, %v139
    %v214 = vpack.c.b16 %v144, %v142
    %v215 = vpack.c.b16 %v145, %v143
    %v216 = vpack.c.b16 %v148, %v146
    %v217 = vpack.c.b16 %v149, %v147
    %v218 = vpack.c.b16 %v152, %v150
    %v219 = vpack.c.b16 %v153, %v151
    %v220 = vpack.c.b16 %v156, %v154
    %v221 = vpack.c.b16 %v157, %v155
    %v222 = vpack.c.b16 %v160, %v158
    %v223 = vpack.c.b16 %v161, %v159
    %v224 = vpack.c.b16 %v164, %v162
    %v225 = vpack.c.b16 %v165, %v163
    %v226 = vpack.c.b16 %v168, %v166
    %v227 = vpack.c.b16 %v169, %v167
    %v228 = vpack.c.b16 %v172, %v170
    %v229 = vpack.c.b16 %v173, %v171
    %v230 = vpack.c.b16 %v176, %v174
    %v231 = vpack.c.b16 %v177, %v175
    %v232 = vpack.c.b16 %v180, %v178
    %v233 = vpack.c.b16 %v181, %v179
    %v234 = vpack.c.b16 %v184, %v182
    %v235 = vpack.c.b16 %v185, %v183
    %v236 = vpack.c.b16 %v188, %v186
    %v237 = vpack.c.b16 %v189, %v187
    %v238 = vpack.c.b16 %v192, %v190
    %v239 = vpack.c.b16 %v193, %v191
    %v240 = vpack.c.b16 %v196, %v194
    %v241 = vpack.c.b16 %v197, %v195
    %v242 = vpack.c.b16 %v200, %v198
    %v243 = vpack.c.b16 %v201, %v199
    %v244 = vpack.c.b16 %v204, %v202
    %v245 = vpack.c.b16 %v205, %v203
    %v246 = vpack.c.b16 %v208, %v206
    %v247 = vpack.c.b16 %v209, %v207
    %vm284 = vcmask 359424
    %v286 = vsel %vm284, %v45, 0
    %vm288 = vcmask 1045504
    %v290 = vsel %vm288, %v246, 0
    %v293 = vsel %vm288, %v247, 0
    %295 = vmatprep.subr.bf16.mxu0 %v225
    %296 = vmatpush1.bf16.msra.mxu0 %v224
    %297 = vmatprep.subr.bf16.mxu0 %v223
    %298 = vmatpush1.bf16.msra.mxu0 %v222
    %299 = vmatprep.subr.bf16.mxu0 %v221
    %300 = vmatpush1.bf16.msra.mxu0 %v220
    %301 = vmatprep.subr.bf16.mxu0 %v219
    %302 = vmatpush1.bf16.msra.mxu0 %v218
    %303 = vmatprep.subr.bf16.mxu0 %v217
    %304 = vmatpush1.bf16.msra.mxu0 %v216
    %305 = vmatprep.subr.bf16.mxu0 %v215
    %306 = vmatpush1.bf16.msra.mxu0 %v214
    %307 = vmatprep.subr.bf16.mxu0 %v213
    %308 = vmatpush1.bf16.msra.mxu0 %v212
    %309 = vmatprep.subr.bf16.mxu0 %v211
    %310 = vmatpush1.bf16.msra.mxu0 %v210
    %311 = vmatprep.subr.bf16.mxu0 %v241
    %312 = vmatpush2.bf16.msra.mxu0 %v240
    %313 = vmatprep.subr.bf16.mxu0 %v239
    %314 = vmatpush2.bf16.msra.mxu0 %v238
    %315 = vmatprep.subr.bf16.mxu0 %v237
    %316 = vmatpush2.bf16.msra.mxu0 %v236
    %317 = vmatprep.subr.bf16.mxu0 %v235
    %318 = vmatpush2.bf16.msra.mxu0 %v234
    %319 = vmatprep.subr.bf16.mxu0 %v233
    %320 = vmatpush2.bf16.msra.mxu0 %v232
    %321 = vmatprep.subr.bf16.mxu0 %v231
    %322 = vmatpush2.bf16.msra.mxu0 %v230
    %323 = vmatprep.subr.bf16.mxu0 %v229
    %324 = vmatpush2.bf16.msra.mxu0 %v228
    %325 = vmatprep.subr.bf16.mxu0 %v227
    %326 = vmatpush2.bf16.msra.mxu0 %v226
    %327 = vmatprep.mubr.bf16.mxu0 %v44
    %328 = vmatmul.mubr.bf16.gmra.mxu0 %v43
    %v329 = vpop.f32.mrf.mxu0
    %v330 = vadd.f32 %v89, %v329
    %v331 = vpop.f32.mrf.mxu0
    %v332 = vadd.f32 %v93, %v331
    %v333 = vpop.f32.mrf.mxu0
    %v334 = vpop.f32.mrf.mxu0
    %335 = vdwg.mxu0
    %336 = vmatprep.subr.bf16.mxu0 0
    %337 = vmatpush1.bf16.msra.mxu0 0
    %338 = vmatprep.subr.bf16.mxu0 0
    %339 = vmatpush1.bf16.msra.mxu0 0
    %340 = vmatprep.subr.bf16.mxu0 0
    %341 = vmatpush1.bf16.msra.mxu0 0
    %342 = vmatprep.subr.bf16.mxu0 0
    %343 = vmatpush1.bf16.msra.mxu0 0
    %344 = vmatprep.subr.bf16.mxu0 0
    %345 = vmatpush1.bf16.msra.mxu0 0
    %346 = vmatprep.subr.bf16.mxu0 %v293
    %347 = vmatpush1.bf16.msra.mxu0 %v290
    %348 = vmatprep.subr.bf16.mxu0 %v245
    %349 = vmatpush1.bf16.msra.mxu0 %v244
    %350 = vmatprep.subr.bf16.mxu0 %v243
    %351 = vmatpush1.bf16.msra.mxu0 %v242
    %352 = vmatprep.subr.bf16.mxu0 0
    %353 = vmatpush2.bf16.msra.mxu0 0
    %354 = vmatprep.subr.bf16.mxu0 0
    %355 = vmatpush2.bf16.msra.mxu0 0
    %356 = vmatprep.subr.bf16.mxu0 0
    %357 = vmatpush2.bf16.msra.mxu0 0
    %358 = vmatprep.subr.bf16.mxu0 0
    %359 = vmatpush2.bf16.msra.mxu0 0
    %360 = vmatprep.subr.bf16.mxu0 0
    %361 = vmatpush2.bf16.msra.mxu0 0
    %362 = vmatprep.subr.bf16.mxu0 0
    %363 = vmatpush2.bf16.msra.mxu0 0
    %364 = vmatprep.subr.bf16.mxu0 0
    %365 = vmatpush2.bf16.msra.mxu0 0
    %366 = vmatprep.subr.bf16.mxu0 0
    %367 = vmatpush2.bf16.msra.mxu0 0
    %368 = vmatprep.mubr.bf16.mxu0 0
    %369 = vmatmul.mubr.bf16.gmra.mxu0 %v286
    %v370 = vpop.f32.mrf.mxu0
    %v371 = vadd.f32 %v330, %v370
    %v372 = vpop.f32.mrf.mxu0
    %v373 = vadd.f32 %v332, %v372
    %v374 = vpop.f32.mrf.mxu0
    %v375 = vpop.f32.mrf.mxu0
    %376 = vdwg.mxu0
    %v377 = vtanh.pop %v371
    %v378 = vtanh.pop %v373
    %v379 = vld [vmem:[%s3] sm:$0xff]
    %v380 = vld [vmem:[%s3 + $0x8] sm:$0xff]
    %v381 = vld [vmem:[%s3 + $0x10] sm:$0xff]
    %v382 = vld [vmem:[%s3 + $0x18] sm:$0xf]
    %v383 = vld [vmem:[%s3 + $0x1c] sm:$0xff]
    %v384 = vld [vmem:[%s3 + $0x24] sm:$0xff]
    %v385 = vld [vmem:[%s3 + $0x2c] sm:$0xff]
    %v386 = vld [vmem:[%s3 + $0x34] sm:$0xf]
    %v387 = vld [vmem:[%s3 + $0x38] sm:$0xff]
    %v388 = vld [vmem:[%s3 + $0x40] sm:$0xff]
    %v389 = vld [vmem:[%s3 + $0x48] sm:$0xff]
    %v390 = vld [vmem:[%s3 + $0x50] sm:$0xf]
    %v391 = vld [vmem:[%s3 + $0x54] sm:$0xff]
    %v392 = vld [vmem:[%s3 + $0x5c] sm:$0xff]
    %v393 = vld [vmem:[%s3 + $0x64] sm:$0xff]
    %v394 = vld [vmem:[%s3 + $0x6c] sm:$0xf]
    %v395 = vld [vmem:[%s3 + $0x70] sm:$0xff]
    %v396 = vld [vmem:[%s3 + $0x78] sm:$0xff]
    %v397 = vld [vmem:[%s3 + $0x80] sm:$0xff]
    %v398 = vld [vmem:[%s3 + $0x88] sm:$0xf]
    %v399 = vld [vmem:[%s3 + $0x8c] sm:$0xff]
    %v400 = vld [vmem:[%s3 + $0x94] sm:$0xff]
    %v401 = vld [vmem:[%s3 + $0x9c] sm:$0xff]
    %v402 = vld [vmem:[%s3 + $0xa4] sm:$0xf]
    %v403 = vld [vmem:[%s3 + $0xa8] sm:$0xff]
    %v404 = vld [vmem:[%s3 + $0xb0] sm:$0xff]
    %v405 = vld [vmem:[%s3 + $0xb8] sm:$0xff]
    %v406 = vld [vmem:[%s3 + $0xc0] sm:$0xf]
    %v407 = vld [vmem:[%s3 + $0xc4] sm:$0xff]
    %v408 = vld [vmem:[%s3 + $0xcc] sm:$0xff]
    %v409 = vld [vmem:[%s3 + $0xd4] sm:$0xff]
    %v410 = vld [vmem:[%s3 + $0xdc] sm:$0xf]
    %v411 = vld [vmem:[%s3 + $0xe0] sm:$0xff]
    %v412 = vld [vmem:[%s3 + $0xe8] sm:$0xff]
    %v413 = vld [vmem:[%s3 + $0xf0] sm:$0xff]
    %v414 = vld [vmem:[%s3 + $0xf8] sm:$0xf]
    %v415 = vld [vmem:[%s3 + $0xfc] sm:$0xff]
    %v416 = vld [vmem:[%s3 + $0x104] sm:$0xff]
    %v417 = vld [vmem:[%s3 + $0x10c] sm:$0xff]
    %v418 = vld [vmem:[%s3 + $0x114] sm:$0xf]
    %v419 = vld [vmem:[%s3 + $0x118] sm:$0xff]
    %v420 = vld [vmem:[%s3 + $0x120] sm:$0xff]
    %v421 = vld [vmem:[%s3 + $0x128] sm:$0xff]
    %v422 = vld [vmem:[%s3 + $0x130] sm:$0xf]
    %v423 = vld [vmem:[%s3 + $0x134] sm:$0xff]
    %v424 = vld [vmem:[%s3 + $0x13c] sm:$0xff]
    %v425 = vld [vmem:[%s3 + $0x144] sm:$0xff]
    %v426 = vld [vmem:[%s3 + $0x14c] sm:$0xf]
    %v427 = vld [vmem:[%s3 + $0x150] sm:$0xff]
    %v428 = vld [vmem:[%s3 + $0x158] sm:$0xff]
    %v429 = vld [vmem:[%s3 + $0x160] sm:$0xff]
    %v430 = vld [vmem:[%s3 + $0x168] sm:$0xf]
    %v431 = vld [vmem:[%s3 + $0x16c] sm:$0xff]
    %v432 = vld [vmem:[%s3 + $0x174] sm:$0xff]
    %v433 = vld [vmem:[%s3 + $0x17c] sm:$0xff]
    %v434 = vld [vmem:[%s3 + $0x184] sm:$0xf]
    %v435 = vld [vmem:[%s3 + $0x188] sm:$0xff]
    %v436 = vld [vmem:[%s3 + $0x190] sm:$0xff]
    %v437 = vld [vmem:[%s3 + $0x198] sm:$0xff]
    %v438 = vld [vmem:[%s3 + $0x1a0] sm:$0xf]
    %v439 = vld [vmem:[%s3 + $0x1a4] sm:$0xff]
    %v440 = vld [vmem:[%s3 + $0x1ac] sm:$0xff]
    %v441 = vld [vmem:[%s3 + $0x1b4] sm:$0xff]
    %v442 = vld [vmem:[%s3 + $0x1bc] sm:$0xf]
    %v443 = vld [vmem:[%s3 + $0x1c0] sm:$0xff]
    %v444 = vld [vmem:[%s3 + $0x1c8] sm:$0xff]
    %v445 = vld [vmem:[%s3 + $0x1d0] sm:$0xff]
    %v446 = vld [vmem:[%s3 + $0x1d8] sm:$0xf]
    %v447 = vld [vmem:[%s3 + $0x1dc] sm:$0xff]
    %v448 = vld [vmem:[%s3 + $0x1e4] sm:$0xff]
    %v449 = vld [vmem:[%s3 + $0x1ec] sm:$0xff]
    %v450 = vld [vmem:[%s3 + $0x1f4] sm:$0xf]
    %v451 = vld [vmem:[%s3 + $0x1f8] sm:$0xff]
    %v452 = vld [vmem:[%s3 + $0x200] sm:$0xff]
    %v453 = vld [vmem:[%s3 + $0x208] sm:$0xff]
    %v454 = vld [vmem:[%s3 + $0x210] sm:$0xf]
    %v455 = vld [vmem:[%s3 + $0x214] sm:$0xff]
    %v456 = vld [vmem:[%s3 + $0x21c] sm:$0xff]
    %v457 = vld [vmem:[%s3 + $0x224] sm:$0xff]
    %v458 = vld [vmem:[%s3 + $0x22c] sm:$0xf]
    %v459 = vld [vmem:[%s3 + $0x230] sm:$0xff]
    %v460 = vld [vmem:[%s3 + $0x238] sm:$0xff]
    %v461 = vld [vmem:[%s3 + $0x240] sm:$0xff]
    %v462 = vld [vmem:[%s3 + $0x248] sm:$0xf]
    %v463 = vld [vmem:[%s3 + $0x24c] sm:$0xff]
    %v464 = vld [vmem:[%s3 + $0x254] sm:$0xff]
    %v465 = vld [vmem:[%s3 + $0x25c] sm:$0xff]
    %v466 = vld [vmem:[%s3 + $0x264] sm:$0xf]
    %v467 = vld [vmem:[%s3 + $0x268] sm:$0xff]
    %v468 = vld [vmem:[%s3 + $0x270] sm:$0xff]
    %v469 = vld [vmem:[%s3 + $0x278] sm:$0xff]
    %v470 = vld [vmem:[%s3 + $0x280] sm:$0xf]
    %v471 = vld [vmem:[%s3 + $0x284] sm:$0xff]
    %v472 = vld [vmem:[%s3 + $0x28c] sm:$0xff]
    %v473 = vld [vmem:[%s3 + $0x294] sm:$0xff]
    %v474 = vld [vmem:[%s3 + $0x29c] sm:$0xf]
    %v475 = vld [vmem:[%s3 + $0x2a0] sm:$0xff]
    %v476 = vld [vmem:[%s3 + $0x2a8] sm:$0xff]
    %v477 = vld [vmem:[%s3 + $0x2b0] sm:$0xff]
    %v478 = vld [vmem:[%s3 + $0x2b8] sm:$0xf]
    %v479 = vld [vmem:[%s3 + $0x2bc] sm:$0xff]
    %v480 = vld [vmem:[%s3 + $0x2c4] sm:$0xff]
    %v481 = vld [vmem:[%s3 + $0x2cc] sm:$0xff]
    %v482 = vld [vmem:[%s3 + $0x2d4] sm:$0xf]
    %v483 = vld [vmem:[%s3 + $0x2d8] sm:$0xff]
    %v484 = vld [vmem:[%s3 + $0x2e0] sm:$0xff]
    %v485 = vld [vmem:[%s3 + $0x2e8] sm:$0xff]
    %v486 = vld [vmem:[%s3 + $0x2f0] sm:$0xf]
    %v487 = vld [vmem:[%s3 + $0x2f4] sm:$0xff]
    %v488 = vld [vmem:[%s3 + $0x2fc] sm:$0xff]
    %v489 = vld [vmem:[%s3 + $0x304] sm:$0xff]
    %v490 = vld [vmem:[%s3 + $0x30c] sm:$0xf]
    %v491 = vld [vmem:[%s3 + $0x310] sm:$0xff]
    %v492 = vld [vmem:[%s3 + $0x318] sm:$0xff]
    %v493 = vld [vmem:[%s3 + $0x320] sm:$0xff]
    %v494 = vld [vmem:[%s3 + $0x328] sm:$0xf]
    %v495 = vld [vmem:[%s3 + $0x32c] sm:$0xff]
    %v496 = vld [vmem:[%s3 + $0x334] sm:$0xff]
    %v497 = vld [vmem:[%s3 + $0x33c] sm:$0xff]
    %v498 = vld [vmem:[%s3 + $0x344] sm:$0xf]
    %v499 = vld [vmem:[%s3 + $0x348] sm:$0xff]
    %v500 = vld [vmem:[%s3 + $0x350] sm:$0xff]
    %v501 = vld [vmem:[%s3 + $0x358] sm:$0xff]
    %v502 = vld [vmem:[%s3 + $0x360] sm:$0xf]
    %v503 = vld [vmem:[%s3 + $0x364] sm:$0xff]
    %v504 = vld [vmem:[%s3 + $0x36c] sm:$0xff]
    %v505 = vld [vmem:[%s3 + $0x374] sm:$0xff]
    %v506 = vld [vmem:[%s3 + $0x37c] sm:$0xf]
    %v507 = vunpack.c.l.bf16 %v379
    %v508 = vunpack.c.h.bf16 %v379
    %v509 = vunpack.c.l.bf16 %v380
    %v510 = vunpack.c.h.bf16 %v380
    %v511 = vunpack.c.l.bf16 %v381
    %v512 = vunpack.c.h.bf16 %v381
    %v513 = vunpack.c.l.bf16 %v382
    %v514 = vunpack.c.l.bf16 %v383
    %v515 = vunpack.c.h.bf16 %v383
    %v516 = vunpack.c.l.bf16 %v384
    %v517 = vunpack.c.h.bf16 %v384
    %v518 = vunpack.c.l.bf16 %v385
    %v519 = vunpack.c.h.bf16 %v385
    %v520 = vunpack.c.l.bf16 %v386
    %v521 = vunpack.c.l.bf16 %v387
    %v522 = vunpack.c.h.bf16 %v387
    %v523 = vunpack.c.l.bf16 %v388
    %v524 = vunpack.c.h.bf16 %v388
    %v525 = vunpack.c.l.bf16 %v389
    %v526 = vunpack.c.h.bf16 %v389
    %v527 = vunpack.c.l.bf16 %v390
    %v528 = vunpack.c.l.bf16 %v391
    %v529 = vunpack.c.h.bf16 %v391
    %v530 = vunpack.c.l.bf16 %v392
    %v531 = vunpack.c.h.bf16 %v392
    %v532 = vunpack.c.l.bf16 %v393
    %v533 = vunpack.c.h.bf16 %v393
    %v534 = vunpack.c.l.bf16 %v394
    %v535 = vunpack.c.l.bf16 %v395
    %v536 = vunpack.c.h.bf16 %v395
    %v537 = vunpack.c.l.bf16 %v396
    %v538 = vunpack.c.h.bf16 %v396
    %v539 = vunpack.c.l.bf16 %v397
    %v540 = vunpack.c.h.bf16 %v397
    %v541 = vunpack.c.l.bf16 %v398
    %v542 = vunpack.c.l.bf16 %v399
    %v543 = vunpack.c.h.bf16 %v399
    %v544 = vunpack.c.l.bf16 %v400
    %v545 = vunpack.c.h.bf16 %v400
    %v546 = vunpack.c.l.bf16 %v401
    %v547 = vunpack.c.h.bf16 %v401
    %v548 = vunpack.c.l.bf16 %v402
    %v549 = vunpack.c.l.bf16 %v403
    %v550 = vunpack.c.h.bf16 %v403
    %v551 = vunpack.c.l.bf16 %v404
    %v552 = vunpack.c.h.bf16 %v404
    %v553 = vunpack.c.l.bf16 %v405
    %v554 = vunpack.c.h.bf16 %v405
    %v555 = vunpack.c.l.bf16 %v406
    %v556 = vunpack.c.l.bf16 %v407
    %v557 = vunpack.c.h.bf16 %v407
    %v558 = vunpack.c.l.bf16 %v408
    %v559 = vunpack.c.h.bf16 %v408
    %v560 = vunpack.c.l.bf16 %v409
    %v561 = vunpack.c.h.bf16 %v409
    %v562 = vunpack.c.l.bf16 %v410
    %v563 = vunpack.c.l.bf16 %v411
    %v564 = vunpack.c.h.bf16 %v411
    %v565 = vunpack.c.l.bf16 %v412
    %v566 = vunpack.c.h.bf16 %v412
    %v567 = vunpack.c.l.bf16 %v413
    %v568 = vunpack.c.h.bf16 %v413
    %v569 = vunpack.c.l.bf16 %v414
    %v570 = vunpack.c.l.bf16 %v415
    %v571 = vunpack.c.h.bf16 %v415
    %v572 = vunpack.c.l.bf16 %v416
    %v573 = vunpack.c.h.bf16 %v416
    %v574 = vunpack.c.l.bf16 %v417
    %v575 = vunpack.c.h.bf16 %v417
    %v576 = vunpack.c.l.bf16 %v418
    %v577 = vunpack.c.l.bf16 %v419
    %v578 = vunpack.c.h.bf16 %v419
    %v579 = vunpack.c.l.bf16 %v420
    %v580 = vunpack.c.h.bf16 %v420
    %v581 = vunpack.c.l.bf16 %v421
    %v582 = vunpack.c.h.bf16 %v421
    %v583 = vunpack.c.l.bf16 %v422
    %v584 = vunpack.c.l.bf16 %v423
    %v585 = vunpack.c.h.bf16 %v423
    %v586 = vunpack.c.l.bf16 %v424
    %v587 = vunpack.c.h.bf16 %v424
    %v588 = vunpack.c.l.bf16 %v425
    %v589 = vunpack.c.h.bf16 %v425
    %v590 = vunpack.c.l.bf16 %v426
    %v591 = vunpack.c.l.bf16 %v427
    %v592 = vunpack.c.h.bf16 %v427
    %v593 = vunpack.c.l.bf16 %v428
    %v594 = vunpack.c.h.bf16 %v428
    %v595 = vunpack.c.l.bf16 %v429
    %v596 = vunpack.c.h.bf16 %v429
    %v597 = vunpack.c.l.bf16 %v430
    %v598 = vunpack.c.l.bf16 %v431
    %v599 = vunpack.c.h.bf16 %v431
    %v600 = vunpack.c.l.bf16 %v432
    %v601 = vunpack.c.h.bf16 %v432
    %v602 = vunpack.c.l.bf16 %v433
    %v603 = vunpack.c.h.bf16 %v433
    %v604 = vunpack.c.l.bf16 %v434
    %v605 = vunpack.c.l.bf16 %v435
    %v606 = vunpack.c.h.bf16 %v435
    %v607 = vunpack.c.l.bf16 %v436
    %v608 = vunpack.c.h.bf16 %v436
    %v609 = vunpack.c.l.bf16 %v437
    %v610 = vunpack.c.h.bf16 %v437
    %v611 = vunpack.c.l.bf16 %v438
    %v612 = vunpack.c.l.bf16 %v439
    %v613 = vunpack.c.h.bf16 %v439
    %v614 = vunpack.c.l.bf16 %v440
    %v615 = vunpack.c.h.bf16 %v440
    %v616 = vunpack.c.l.bf16 %v441
    %v617 = vunpack.c.h.bf16 %v441
    %v618 = vunpack.c.l.bf16 %v442
    %v619 = vunpack.c.l.bf16 %v443
    %v620 = vunpack.c.h.bf16 %v443
    %v621 = vunpack.c.l.bf16 %v444
    %v622 = vunpack.c.h.bf16 %v444
    %v623 = vunpack.c.l.bf16 %v445
    %v624 = vunpack.c.h.bf16 %v445
    %v625 = vunpack.c.l.bf16 %v446
    %v626 = vunpack.c.l.bf16 %v447
    %v627 = vunpack.c.h.bf16 %v447
    %v628 = vunpack.c.l.bf16 %v448
    %v629 = vunpack.c.h.bf16 %v448
    %v630 = vunpack.c.l.bf16 %v449
    %v631 = vunpack.c.h.bf16 %v449
    %v632 = vunpack.c.l.bf16 %v450
    %v633 = vunpack.c.l.bf16 %v451
    %v634 = vunpack.c.h.bf16 %v451
    %v635 = vunpack.c.l.bf16 %v452
    %v636 = vunpack.c.h.bf16 %v452
    %v637 = vunpack.c.l.bf16 %v453
    %v638 = vunpack.c.h.bf16 %v453
    %v639 = vunpack.c.l.bf16 %v454
    %v640 = vunpack.c.l.bf16 %v455
    %v641 = vunpack.c.h.bf16 %v455
    %v642 = vunpack.c.l.bf16 %v456
    %v643 = vunpack.c.h.bf16 %v456
    %v644 = vunpack.c.l.bf16 %v457
    %v645 = vunpack.c.h.bf16 %v457
    %v646 = vunpack.c.l.bf16 %v458
    %v647 = vunpack.c.l.bf16 %v459
    %v648 = vunpack.c.h.bf16 %v459
    %v649 = vunpack.c.l.bf16 %v460
    %v650 = vunpack.c.h.bf16 %v460
    %v651 = vunpack.c.l.bf16 %v461
    %v652 = vunpack.c.h.bf16 %v461
    %v653 = vunpack.c.l.bf16 %v462
    %v654 = vunpack.c.l.bf16 %v463
    %v655 = vunpack.c.h.bf16 %v463
    %v656 = vunpack.c.l.bf16 %v464
    %v657 = vunpack.c.h.bf16 %v464
    %v658 = vunpack.c.l.bf16 %v465
    %v659 = vunpack.c.h.bf16 %v465
    %v660 = vunpack.c.l.bf16 %v466
    %v661 = vunpack.c.l.bf16 %v467
    %v662 = vunpack.c.h.bf16 %v467
    %v663 = vunpack.c.l.bf16 %v468
    %v664 = vunpack.c.h.bf16 %v468
    %v665 = vunpack.c.l.bf16 %v469
    %v666 = vunpack.c.h.bf16 %v469
    %v667 = vunpack.c.l.bf16 %v470
    %v668 = vunpack.c.l.bf16 %v471
    %v669 = vunpack.c.h.bf16 %v471
    %v670 = vunpack.c.l.bf16 %v472
    %v671 = vunpack.c.h.bf16 %v472
    %v672 = vunpack.c.l.bf16 %v473
    %v673 = vunpack.c.h.bf16 %v473
    %v674 = vunpack.c.l.bf16 %v474
    %v675 = vunpack.c.l.bf16 %v475
    %v676 = vunpack.c.h.bf16 %v475
    %v677 = vunpack.c.l.bf16 %v476
    %v678 = vunpack.c.h.bf16 %v476
    %v679 = vunpack.c.l.bf16 %v477
    %v680 = vunpack.c.h.bf16 %v477
    %v681 = vunpack.c.l.bf16 %v478
    %v682 = vunpack.c.l.bf16 %v479
    %v683 = vunpack.c.h.bf16 %v479
    %v684 = vunpack.c.l.bf16 %v480
    %v685 = vunpack.c.h.bf16 %v480
    %v686 = vunpack.c.l.bf16 %v481
    %v687 = vunpack.c.h.bf16 %v481
    %v688 = vunpack.c.l.bf16 %v482
    %v689 = vunpack.c.l.bf16 %v483
    %v690 = vunpack.c.h.bf16 %v483
    %v691 = vunpack.c.l.bf16 %v484
    %v692 = vunpack.c.h.bf16 %v484
    %v693 = vunpack.c.l.bf16 %v485
    %v694 = vunpack.c.h.bf16 %v485
    %v695 = vunpack.c.l.bf16 %v486
    %v696 = vunpack.c.l.bf16 %v487
    %v697 = vunpack.c.h.bf16 %v487
    %v698 = vunpack.c.l.bf16 %v488
    %v699 = vunpack.c.h.bf16 %v488
    %v700 = vunpack.c.l.bf16 %v489
    %v701 = vunpack.c.h.bf16 %v489
    %v702 = vunpack.c.l.bf16 %v490
    %v703 = vunpack.c.l.bf16 %v491
    %v704 = vunpack.c.h.bf16 %v491
    %v705 = vunpack.c.l.bf16 %v492
    %v706 = vunpack.c.h.bf16 %v492
    %v707 = vunpack.c.l.bf16 %v493
    %v708 = vunpack.c.h.bf16 %v493
    %v709 = vunpack.c.l.bf16 %v494
    %v710 = vunpack.c.l.bf16 %v495
    %v711 = vunpack.c.h.bf16 %v495
    %v712 = vunpack.c.l.bf16 %v496
    %v713 = vunpack.c.h.bf16 %v496
    %v714 = vunpack.c.l.bf16 %v497
    %v715 = vunpack.c.h.bf16 %v497
    %v716 = vunpack.c.l.bf16 %v498
    %v717 = vunpack.c.l.bf16 %v499
    %v718 = vunpack.c.h.bf16 %v499
    %v719 = vunpack.c.l.bf16 %v500
    %v720 = vunpack.c.h.bf16 %v500
    %v721 = vunpack.c.l.bf16 %v501
    %v722 = vunpack.c.h.bf16 %v501
    %v723 = vunpack.c.l.bf16 %v502
    %v724 = vunpack.c.l.bf16 %v503
    %v725 = vunpack.c.h.bf16 %v503
    %v726 = vunpack.c.l.bf16 %v504
    %v727 = vunpack.c.h.bf16 %v504
    %v728 = vunpack.c.l.bf16 %v505
    %v729 = vunpack.c.h.bf16 %v505
    %v730 = vunpack.c.l.bf16 %v506
    %v731 = vld [vmem:[%s4] sm:$0x7f]
    %v733 = vlaneseq
    %v734 = vshrl.u32 %v733, 7
    %v735 = vsub.s32 0, %v734
    %v736 = vrot.slane %v731, %v735
    %v737 = vlaneseq
    %v738 = vshrl.u32 %v737, 7
    %v739 = vsub.s32 1, %v738
    %v740 = vrot.slane %v731, %v739
    %v741 = vlaneseq
    %v742 = vshrl.u32 %v741, 7
    %v743 = vsub.s32 2, %v742
    %v744 = vrot.slane %v731, %v743
    %v745 = vlaneseq
    %v746 = vshrl.u32 %v745, 7
    %v747 = vsub.s32 3, %v746
    %v748 = vrot.slane %v731, %v747
    %v749 = vlaneseq
    %v750 = vshrl.u32 %v749, 7
    %v751 = vsub.s32 4, %v750
    %v752 = vrot.slane %v731, %v751
    %v753 = vlaneseq
    %v754 = vshrl.u32 %v753, 7
    %v755 = vsub.s32 5, %v754
    %v756 = vrot.slane %v731, %v755
    %v757 = vlaneseq
    %v758 = vshrl.u32 %v757, 7
    %v759 = vsub.s32 6, %v758
    %v760 = vrot.slane %v731, %v759
    %768 = vmatprep.subr.mxu0 %v613
    %769 = vmatpush1.msra.mxu0 %v612
    %770 = vmatprep.subr.mxu0 %v606
    %771 = vmatpush1.msra.mxu0 %v605
    %772 = vmatprep.subr.mxu0 %v599
    %773 = vmatpush1.msra.mxu0 %v598
    %774 = vmatprep.subr.mxu0 %v592
    %775 = vmatpush1.msra.mxu0 %v591
    %776 = vmatprep.subr.mxu0 %v585
    %777 = vmatpush1.msra.mxu0 %v584
    %778 = vmatprep.subr.mxu0 %v578
    %779 = vmatpush1.msra.mxu0 %v577
    %780 = vmatprep.subr.mxu0 %v571
    %781 = vmatpush1.msra.mxu0 %v570
    %782 = vmatprep.subr.mxu0 %v564
    %783 = vmatpush1.msra.mxu0 %v563
    %784 = vmatprep.subr.mxu0 %v557
    %785 = vmatpush1.msra.mxu0 %v556
    %786 = vmatprep.subr.mxu0 %v550
    %787 = vmatpush1.msra.mxu0 %v549
    %788 = vmatprep.subr.mxu0 %v543
    %789 = vmatpush1.msra.mxu0 %v542
    %790 = vmatprep.subr.mxu0 %v536
    %791 = vmatpush1.msra.mxu0 %v535
    %792 = vmatprep.subr.mxu0 %v529
    %793 = vmatpush1.msra.mxu0 %v528
    %794 = vmatprep.subr.mxu0 %v522
    %795 = vmatpush1.msra.mxu0 %v521
    %796 = vmatprep.subr.mxu0 %v515
    %797 = vmatpush1.msra.mxu0 %v514
    %798 = vmatprep.subr.mxu0 %v508
    %799 = vmatpush1.msra.mxu0 %v507
    %800 = vmatprep.subr.mxu0 %v725
    %801 = vmatpush2.msra.mxu0 %v724
    %802 = vmatprep.subr.mxu0 %v718
    %803 = vmatpush2.msra.mxu0 %v717
    %804 = vmatprep.subr.mxu0 %v711
    %805 = vmatpush2.msra.mxu0 %v710
    %806 = vmatprep.subr.mxu0 %v704
    %807 = vmatpush2.msra.mxu0 %v703
    %808 = vmatprep.subr.mxu0 %v697
    %809 = vmatpush2.msra.mxu0 %v696
    %810 = vmatprep.subr.mxu0 %v690
    %811 = vmatpush2.msra.mxu0 %v689
    %812 = vmatprep.subr.mxu0 %v683
    %813 = vmatpush2.msra.mxu0 %v682
    %814 = vmatprep.subr.mxu0 %v676
    %815 = vmatpush2.msra.mxu0 %v675
    %816 = vmatprep.subr.mxu0 %v669
    %817 = vmatpush2.msra.mxu0 %v668
    %818 = vmatprep.subr.mxu0 %v662
    %819 = vmatpush2.msra.mxu0 %v661
    %820 = vmatprep.subr.mxu0 %v655
    %821 = vmatpush2.msra.mxu0 %v654
    %822 = vmatprep.subr.mxu0 %v648
    %823 = vmatpush2.msra.mxu0 %v647
    %824 = vmatprep.subr.mxu0 %v641
    %825 = vmatpush2.msra.mxu0 %v640
    %826 = vmatprep.subr.mxu0 %v634
    %827 = vmatpush2.msra.mxu0 %v633
    %828 = vmatprep.subr.mxu0 %v627
    %829 = vmatpush2.msra.mxu0 %v626
    %830 = vmatprep.subr.mxu0 %v620
    %831 = vmatpush2.msra.mxu0 %v619
    %832 = vmatprep.mubr.f32.mxu0 %v378
    %833 = vmatmul.mubr.f32.gmra.mxu0 %v377
    %v834 = vpop.f32.mrf.mxu0
    %v835 = vadd.f32 %v736, %v834
    %v836 = vpop.f32.mrf.mxu0
    %v837 = vadd.f32 %v740, %v836
    %838 = vdwg.mxu0
    %839 = vmatprep.subr.mxu0 %v615
    %840 = vmatpush1.msra.mxu0 %v614
    %841 = vmatprep.subr.mxu0 %v608
    %842 = vmatpush1.msra.mxu0 %v607
    %843 = vmatprep.subr.mxu0 %v601
    %844 = vmatpush1.msra.mxu0 %v600
    %845 = vmatprep.subr.mxu0 %v594
    %846 = vmatpush1.msra.mxu0 %v593
    %847 = vmatprep.subr.mxu0 %v587
    %848 = vmatpush1.msra.mxu0 %v586
    %849 = vmatprep.subr.mxu0 %v580
    %850 = vmatpush1.msra.mxu0 %v579
    %851 = vmatprep.subr.mxu0 %v573
    %852 = vmatpush1.msra.mxu0 %v572
    %853 = vmatprep.subr.mxu0 %v566
    %854 = vmatpush1.msra.mxu0 %v565
    %855 = vmatprep.subr.mxu0 %v559
    %856 = vmatpush1.msra.mxu0 %v558
    %857 = vmatprep.subr.mxu0 %v552
    %858 = vmatpush1.msra.mxu0 %v551
    %859 = vmatprep.subr.mxu0 %v545
    %860 = vmatpush1.msra.mxu0 %v544
    %861 = vmatprep.subr.mxu0 %v538
    %862 = vmatpush1.msra.mxu0 %v537
    %863 = vmatprep.subr.mxu0 %v531
    %864 = vmatpush1.msra.mxu0 %v530
    %865 = vmatprep.subr.mxu0 %v524
    %866 = vmatpush1.msra.mxu0 %v523
    %867 = vmatprep.subr.mxu0 %v517
    %868 = vmatpush1.msra.mxu0 %v516
    %869 = vmatprep.subr.mxu0 %v510
    %870 = vmatpush1.msra.mxu0 %v509
    %871 = vmatprep.subr.mxu0 %v727
    %872 = vmatpush2.msra.mxu0 %v726
    %873 = vmatprep.subr.mxu0 %v720
    %874 = vmatpush2.msra.mxu0 %v719
    %875 = vmatprep.subr.mxu0 %v713
    %876 = vmatpush2.msra.mxu0 %v712
    %877 = vmatprep.subr.mxu0 %v706
    %878 = vmatpush2.msra.mxu0 %v705
    %879 = vmatprep.subr.mxu0 %v699
    %880 = vmatpush2.msra.mxu0 %v698
    %881 = vmatprep.subr.mxu0 %v692
    %882 = vmatpush2.msra.mxu0 %v691
    %883 = vmatprep.subr.mxu0 %v685
    %884 = vmatpush2.msra.mxu0 %v684
    %885 = vmatprep.subr.mxu0 %v678
    %886 = vmatpush2.msra.mxu0 %v677
    %887 = vmatprep.subr.mxu0 %v671
    %888 = vmatpush2.msra.mxu0 %v670
    %889 = vmatprep.subr.mxu0 %v664
    %890 = vmatpush2.msra.mxu0 %v663
    %891 = vmatprep.subr.mxu0 %v657
    %892 = vmatpush2.msra.mxu0 %v656
    %893 = vmatprep.subr.mxu0 %v650
    %894 = vmatpush2.msra.mxu0 %v649
    %895 = vmatprep.subr.mxu0 %v643
    %896 = vmatpush2.msra.mxu0 %v642
    %897 = vmatprep.subr.mxu0 %v636
    %898 = vmatpush2.msra.mxu0 %v635
    %899 = vmatprep.subr.mxu0 %v629
    %900 = vmatpush2.msra.mxu0 %v628
    %901 = vmatprep.subr.mxu0 %v622
    %902 = vmatpush2.msra.mxu0 %v621
    %903 = vmatprep.mubr.f32.mxu0 %v378
    %904 = vmatmul.mubr.f32.gmra.mxu0 %v377
    %v905 = vpop.f32.mrf.mxu0
    %v906 = vadd.f32 %v744, %v905
    %v907 = vpop.f32.mrf.mxu0
    %v908 = vadd.f32 %v748, %v907
    %909 = vdwg.mxu0
    %910 = vmatprep.subr.mxu0 %v617
    %911 = vmatpush1.msra.mxu0 %v616
    %912 = vmatprep.subr.mxu0 %v610
    %913 = vmatpush1.msra.mxu0 %v609
    %914 = vmatprep.subr.mxu0 %v603
    %915 = vmatpush1.msra.mxu0 %v602
    %916 = vmatprep.subr.mxu0 %v596
    %917 = vmatpush1.msra.mxu0 %v595
    %918 = vmatprep.subr.mxu0 %v589
    %919 = vmatpush1.msra.mxu0 %v588
    %920 = vmatprep.subr.mxu0 %v582
    %921 = vmatpush1.msra.mxu0 %v581
    %922 = vmatprep.subr.mxu0 %v575
    %923 = vmatpush1.msra.mxu0 %v574
    %924 = vmatprep.subr.mxu0 %v568
    %925 = vmatpush1.msra.mxu0 %v567
    %926 = vmatprep.subr.mxu0 %v561
    %927 = vmatpush1.msra.mxu0 %v560
    %928 = vmatprep.subr.mxu0 %v554
    %929 = vmatpush1.msra.mxu0 %v553
    %930 = vmatprep.subr.mxu0 %v547
    %931 = vmatpush1.msra.mxu0 %v546
    %932 = vmatprep.subr.mxu0 %v540
    %933 = vmatpush1.msra.mxu0 %v539
    %934 = vmatprep.subr.mxu0 %v533
    %935 = vmatpush1.msra.mxu0 %v532
    %936 = vmatprep.subr.mxu0 %v526
    %937 = vmatpush1.msra.mxu0 %v525
    %938 = vmatprep.subr.mxu0 %v519
    %939 = vmatpush1.msra.mxu0 %v518
    %940 = vmatprep.subr.mxu0 %v512
    %941 = vmatpush1.msra.mxu0 %v511
    %942 = vmatprep.subr.mxu0 %v729
    %943 = vmatpush2.msra.mxu0 %v728
    %944 = vmatprep.subr.mxu0 %v722
    %945 = vmatpush2.msra.mxu0 %v721
    %946 = vmatprep.subr.mxu0 %v715
    %947 = vmatpush2.msra.mxu0 %v714
    %948 = vmatprep.subr.mxu0 %v708
    %949 = vmatpush2.msra.mxu0 %v707
    %950 = vmatprep.subr.mxu0 %v701
    %951 = vmatpush2.msra.mxu0 %v700
    %952 = vmatprep.subr.mxu0 %v694
    %953 = vmatpush2.msra.mxu0 %v693
    %954 = vmatprep.subr.mxu0 %v687
    %955 = vmatpush2.msra.mxu0 %v686
    %956 = vmatprep.subr.mxu0 %v680
    %957 = vmatpush2.msra.mxu0 %v679
    %958 = vmatprep.subr.mxu0 %v673
    %959 = vmatpush2.msra.mxu0 %v672
    %960 = vmatprep.subr.mxu0 %v666
    %961 = vmatpush2.msra.mxu0 %v665
    %962 = vmatprep.subr.mxu0 %v659
    %963 = vmatpush2.msra.mxu0 %v658
    %964 = vmatprep.subr.mxu0 %v652
    %965 = vmatpush2.msra.mxu0 %v651
    %966 = vmatprep.subr.mxu0 %v645
    %967 = vmatpush2.msra.mxu0 %v644
    %968 = vmatprep.subr.mxu0 %v638
    %969 = vmatpush2.msra.mxu0 %v637
    %970 = vmatprep.subr.mxu0 %v631
    %971 = vmatpush2.msra.mxu0 %v630
    %972 = vmatprep.subr.mxu0 %v624
    %973 = vmatpush2.msra.mxu0 %v623
    %974 = vmatprep.mubr.f32.mxu0 %v378
    %975 = vmatmul.mubr.f32.gmra.mxu0 %v377
    %v976 = vpop.f32.mrf.mxu0
    %v977 = vadd.f32 %v752, %v976
    %v978 = vpop.f32.mrf.mxu0
    %v979 = vadd.f32 %v756, %v978
    %980 = vdwg.mxu0
    %981 = vmatprep.subr.mxu0 0.0
    %982 = vmatpush1.msra.mxu0 %v618
    %983 = vmatprep.subr.mxu0 0.0
    %984 = vmatpush1.msra.mxu0 %v611
    %985 = vmatprep.subr.mxu0 0.0
    %986 = vmatpush1.msra.mxu0 %v604
    %987 = vmatprep.subr.mxu0 0.0
    %988 = vmatpush1.msra.mxu0 %v597
    %989 = vmatprep.subr.mxu0 0.0
    %990 = vmatpush1.msra.mxu0 %v590
    %991 = vmatprep.subr.mxu0 0.0
    %992 = vmatpush1.msra.mxu0 %v583
    %993 = vmatprep.subr.mxu0 0.0
    %994 = vmatpush1.msra.mxu0 %v576
    %995 = vmatprep.subr.mxu0 0.0
    %996 = vmatpush1.msra.mxu0 %v569
    %997 = vmatprep.subr.mxu0 0.0
    %998 = vmatpush1.msra.mxu0 %v562
    %999 = vmatprep.subr.mxu0 0.0
    %1000 = vmatpush1.msra.mxu0 %v555
    %1001 = vmatprep.subr.mxu0 0.0
    %1002 = vmatpush1.msra.mxu0 %v548
    %1003 = vmatprep.subr.mxu0 0.0
    %1004 = vmatpush1.msra.mxu0 %v541
    %1005 = vmatprep.subr.mxu0 0.0
    %1006 = vmatpush1.msra.mxu0 %v534
    %1007 = vmatprep.subr.mxu0 0.0
    %1008 = vmatpush1.msra.mxu0 %v527
    %1009 = vmatprep.subr.mxu0 0.0
    %1010 = vmatpush1.msra.mxu0 %v520
    %1011 = vmatprep.subr.mxu0 0.0
    %1012 = vmatpush1.msra.mxu0 %v513
    %1013 = vmatprep.subr.mxu0 0.0
    %1014 = vmatpush2.msra.mxu0 %v730
    %1015 = vmatprep.subr.mxu0 0.0
    %1016 = vmatpush2.msra.mxu0 %v723
    %1017 = vmatprep.subr.mxu0 0.0
    %1018 = vmatpush2.msra.mxu0 %v716
    %1019 = vmatprep.subr.mxu0 0.0
    %1020 = vmatpush2.msra.mxu0 %v709
    %1021 = vmatprep.subr.mxu0 0.0
    %1022 = vmatpush2.msra.mxu0 %v702
    %1023 = vmatprep.subr.mxu0 0.0
    %1024 = vmatpush2.msra.mxu0 %v695
    %1025 = vmatprep.subr.mxu0 0.0
    %1026 = vmatpush2.msra.mxu0 %v688
    %1027 = vmatprep.subr.mxu0 0.0
    %1028 = vmatpush2.msra.mxu0 %v681
    %1029 = vmatprep.subr.mxu0 0.0
    %1030 = vmatpush2.msra.mxu0 %v674
    %1031 = vmatprep.subr.mxu0 0.0
    %1032 = vmatpush2.msra.mxu0 %v667
    %1033 = vmatprep.subr.mxu0 0.0
    %1034 = vmatpush2.msra.mxu0 %v660
    %1035 = vmatprep.subr.mxu0 0.0
    %1036 = vmatpush2.msra.mxu0 %v653
    %1037 = vmatprep.subr.mxu0 0.0
    %1038 = vmatpush2.msra.mxu0 %v646
    %1039 = vmatprep.subr.mxu0 0.0
    %1040 = vmatpush2.msra.mxu0 %v639
    %1041 = vmatprep.subr.mxu0 0.0
    %1042 = vmatpush2.msra.mxu0 %v632
    %1043 = vmatprep.subr.mxu0 0.0
    %1044 = vmatpush2.msra.mxu0 %v625
    %1045 = vmatprep.mubr.f32.mxu0 %v378
    %1046 = vmatmul.mubr.f32.gmra.mxu0 %v377
    %v1047 = vpop.f32.mrf.mxu0
    %v1048 = vadd.f32 %v760, %v1047
    %v1049 = vpop.f32.mrf.mxu0
    %1050 = vdwg.mxu0
    %v1058 = vcombine.low %v835, %v837
    %v1059 = vcombine.low %v906, %v908
    %v1061 = vunpack.c.l.s4 1983009808
    %v1062 = vunpack.c.0.s8 %v1061
    %v1063 = vlaneseq
    %v1064 = vshrl.u32 %v1063, 7
    %v1065 = vsub.s32 %v1062, %v1064
    %v1066 = vrot.slane %v1058, %v1065
    %v1068 = vunpack.c.l.s4 1983009808
    %v1069 = vunpack.c.0.s8 %v1068
    %v1070 = vlaneseq
    %v1071 = vshrl.u32 %v1070, 7
    %v1072 = vsub.s32 %v1069, %v1071
    %v1073 = vrot.slane %v1059, %v1072
    %v1074 = vcombine.low %v1066, %v1073
    %v1075 = vcombine.low %v977, %v979
    %v1077 = vunpack.c.l.s4 1983009808
    %v1078 = vunpack.c.0.s8 %v1077
    %v1079 = vlaneseq
    %v1080 = vshrl.u32 %v1079, 7
    %v1081 = vsub.s32 %v1078, %v1080
    %v1082 = vrot.slane %v1075, %v1081
    %v1084 = vunpack.c.l.s4 1983009808
    %v1085 = vunpack.c.0.s8 %v1084
    %v1086 = vlaneseq
    %v1087 = vshrl.u32 %v1086, 7
    %v1088 = vsub.s32 %v1085, %v1087
    %v1089 = vrot.slane %v1048, %v1088
    %v1090 = vcombine.low %v1082, %v1089
    %1093 = vst [vmem:[#allocation2] sm:$0xff] %v1074
    %vm1094 = vcmask 1041408
    %vm1095 = vcmask 1043458
    %vm1096 = vmor %vm1095, %vm1094
    %vm1097 = vcmask 128004
    %vm1098 = vmor %vm1097, %vm1096
    %1099 = vst.msk [vmem:[#allocation2 + $0x8] sm:$0x3f] %vm1098, %v1090
    // Predicated region
    $region22: #{_decoder_call.1} parent=1 // pred_check
      _
    $region23: #{_decoder_call.1} parent=1 // pred_check_branch
      %1101 = sbr.rel (0) target = $region25
    $region24: #{_decoder_call.1} parent=1 // pred_region
      %s1103 = ssub.s32 224, 224
      %1104 = vsyncadd [#allocation3], %s1103
      %s1106 = sshll.u32 [#allocation2], 4
      %s1107 = int_to_ptr.vmem [resolvable:$true] %s1106
      %1109 = dma.vmem_to_hbm [thread:$0]  %s1107, 224, %s5, [#allocation3]
    $region25: #{_decoder_call.1} parent=1 // pred_fallthru
      _
    // Predicated region
    $region26: #{_decoder_call.1} parent=1 // pred_check
      _
    $region27: #{_decoder_call.1} parent=1 // pred_check_branch
      %1111 = sbr.rel (0) target = $region29
    $region28: #{_decoder_call.1} parent=1 // pred_region
      %1112 = dma.done [#allocation3], 224
    $region29: #{_decoder_call.1} parent=1 // pred_fallthru
      _
    %1113 = vsyncpa [#allocation3], 1

</llo_original>
